<compile_context>
chip_gen: v7x
topology: tpu7x:2x2x1
jax: 0.10.0
libtpu: 0.0.40
codegen_flags: <defaults>
</compile_context>

<pallas_src>
import functools

import jax
import jax.numpy as jnp
from jax.experimental import pallas as pl
from jax.experimental.pallas import tpu as pltpu

_NEG_BIG = -1e30  # effectively -inf for padded action columns (exp -> exactly 0)


def _round_up(n, m):
    return ((n + m - 1) // m) * m


def actor_kernel(x_ref, w1_ref, b1_ref, w2_ref, b2_ref, out_ref):
    # One batch tile per grid step; weights/biases are VMEM-resident.
    x = x_ref[...]                                                    # (TB, S) bf16
    h = jnp.dot(x, w1_ref[...],
                preferred_element_type=jnp.float32) + b1_ref[...]     # (TB, HP) f32
    h = jnp.maximum(h, 0.0)                                           # ReLU (f32)
    logits = jnp.dot(h.astype(jnp.bfloat16), w2_ref[...],
                     preferred_element_type=jnp.float32) + b2_ref[...]  # (TB, AP) f32
    # Row-wise softmax in f32; padded action columns carry a -1e30 bias so they
    # contribute exactly 0 to numerator and denominator.
    m = jnp.max(logits, axis=-1, keepdims=True)
    e = jnp.exp(logits - m)
    s = jnp.sum(e, axis=-1, keepdims=True)
    out_ref[...] = e / s                     # exact normalization (rows sum to 1)


def prepare_actor_params(w1, b1, w2, b2):
    """Pad & cast parameters once (hoisted out of the per-call path).

    w1: (S, H), b1: (1, H), w2: (H, A), b2: (1, A)  ->
      w1p: (S, HP)  bf16  (zero-padded hidden cols)
      b1p: (1, HP)  f32   (zero-padded)
      w2p: (HP, AP) bf16  (zero-padded hidden rows / action cols)
      b2p: (1, AP)  f32   (-1e30 on padded action cols)
    """
    S, H = w1.shape
    A = w2.shape[1]
    HP = _round_up(H, 128)              # MXU-aligned contraction axis
    AP = _round_up(A, 8)                # narrow, 8-aligned output width

    w1p = jnp.pad(w1, ((0, 0), (0, HP - H))).astype(jnp.bfloat16)
    b1p = jnp.pad(b1.reshape(1, -1).astype(jnp.float32), ((0, 0), (0, HP - H)))
    w2p = jnp.pad(w2, ((0, HP - H), (0, AP - A))).astype(jnp.bfloat16)
    b2p = jnp.pad(b2.reshape(1, -1).astype(jnp.float32), ((0, 0), (0, AP - A)),
                  constant_values=_NEG_BIG)
    return w1p, b1p, w2p, b2p


@functools.partial(jax.jit, static_argnames=("num_action", "block_b"))
def actor_forward(x, w1p, b1p, w2p, b2p, *, num_action, block_b=2048):
    """x: (B, S) f32; padded params from prepare_actor_params."""
    B, S = x.shape
    HP = w1p.shape[1]
    AP = w2p.shape[1]

    # Batch tile: multiple of 16 (bf16 sublane packing), capped at block_b.
    blk = max(16, _round_up(block_b, 16))
    TB = min(blk, _round_up(B, 16))
    # v7x megacore: guarantee >= 2 "parallel" grid steps for large batches so
    # both TensorCores are used; no-op on single-TC v5e/v6e.
    if B >= 512 and _round_up(B, TB) // TB < 2:
        TB = max(256, _round_up((B + 1) // 2, 16))
    Bp = _round_up(B, TB)

    xb = x.astype(jnp.bfloat16)                       # halve x-read DMA traffic
    xp = xb if Bp == B else jnp.pad(xb, ((0, Bp - B), (0, 0)))

    out = pl.pallas_call(
        actor_kernel,
        out_shape=jax.ShapeDtypeStruct((Bp, AP), jnp.float32),
        grid=(Bp // TB,),
        in_specs=[
            pl.BlockSpec((TB, S), lambda i: (i, 0)),      # x: tiled over batch
            pl.BlockSpec((S, HP), lambda i: (0, 0)),      # w1: VMEM-resident
            pl.BlockSpec((1, HP), lambda i: (0, 0)),      # b1
            pl.BlockSpec((HP, AP), lambda i: (0, 0)),     # w2
            pl.BlockSpec((1, AP), lambda i: (0, 0)),      # b2 (-1e30 on pad)
        ],
        out_specs=pl.BlockSpec((TB, AP), lambda i: (i, 0)),
        compiler_params=pltpu.CompilerParams(
            dimension_semantics=("parallel",),            # megacore on v7x
        ),
    )(xp, w1p, b1p, w2p, b2p)

    if Bp == B and AP == num_action:
        return out
    return out[:B, :num_action]


def _reference(x, w1, b1, w2, b2):
    h = jnp.maximum(x @ w1 + b1, 0.0)
    return jax.nn.softmax(h @ w2 + b2, axis=1)


if __name__ == "__main__":
    # Small shapes consistent with the module: Actor(num_state=32, num_action=6)
    num_state = 32
    hidden = 100
    num_action = 6

    key = jax.random.PRNGKey(0)
    kx, k1, k2, k3, k4, kx2 = jax.random.split(key, 6)

    # Deterministic synthetic parameters (PyTorch-style uniform(-1/sqrt(fan_in))).
    lim1 = 1.0 / jnp.sqrt(jnp.float32(num_state))
    lim2 = 1.0 / jnp.sqrt(jnp.float32(hidden))
    w1 = jax.random.uniform(k1, (num_state, hidden), jnp.float32, -lim1, lim1)
    b1 = jax.random.uniform(k2, (1, hidden), jnp.float32, -lim1, lim1)
    w2 = jax.random.uniform(k3, (hidden, num_action), jnp.float32, -lim2, lim2)
    b2 = jax.random.uniform(k4, (1, num_action), jnp.float32, -lim2, lim2)

    params = prepare_actor_params(w1, b1, w2, b2)   # pad/cast once

    # Check 1: small batch, single grid step.
    x = jax.random.normal(kx, (8, num_state), jnp.float32)
    probs = actor_forward(x, *params, num_action=num_action)
    jax.block_until_ready(probs)
    ref = _reference(x, w1, b1, w2, b2)
    assert probs.shape == (8, num_action)
    assert jnp.allclose(probs, ref, atol=2e-3, rtol=2e-3)        # bf16 matmul inputs
    assert jnp.allclose(jnp.sum(probs, axis=1), 1.0, atol=1e-4)  # exact normalization

    # Check 2: batch not a multiple of the tile -> exercises padding + multi-step grid.
    x2 = jax.random.normal(kx2, (20, num_state), jnp.float32)
    probs2 = actor_forward(x2, *params, num_action=num_action, block_b=16)
    jax.block_until_ready(probs2)
    ref2 = _reference(x2, w1, b1, w2, b2)
    assert probs2.shape == (20, num_action)
    assert jnp.allclose(probs2, ref2, atol=2e-3, rtol=2e-3)
    assert jnp.allclose(jnp.sum(probs2, axis=1), 1.0, atol=1e-4)

    print("KERNEL_OK")
</pallas_src>

<mosaic_0001>
module attributes {stable_mosaic.version = 11 : i64} {
  func.func @actor_kernel(%arg0: i32, %arg1: memref<16x32xbf16, #tpu.memory_space<vmem>>, %arg2: memref<32x128xbf16, #tpu.memory_space<vmem>>, %arg3: memref<1x128xf32, #tpu.memory_space<vmem>>, %arg4: memref<128x8xbf16, #tpu.memory_space<vmem>>, %arg5: memref<1x8xf32, #tpu.memory_space<vmem>>, %arg6: memref<16x8xf32, #tpu.memory_space<vmem>>) attributes {dimension_semantics = [#tpu.dimension_semantics<parallel>], iteration_bounds = array<i64: 1>, scalar_prefetch = 0 : i64, scratch_operands = 0 : i64, tpu.core_type = #tpu.core_type<tc>, window_params = [{transform_indices = @transform_0, window_bounds = array<i64: 16, 32>}, {pipeline_mode = #tpu.pipeline_mode<synchronous>, transform_indices = @transform_1, window_bounds = array<i64: 32, 128>}, {pipeline_mode = #tpu.pipeline_mode<synchronous>, transform_indices = @transform_2, window_bounds = array<i64: 1, 128>}, {pipeline_mode = #tpu.pipeline_mode<synchronous>, transform_indices = @transform_3, window_bounds = array<i64: 128, 8>}, {pipeline_mode = #tpu.pipeline_mode<synchronous>, transform_indices = @transform_4, window_bounds = array<i64: 1, 8>}, {transform_indices = @transform_5, window_bounds = array<i64: 16, 8>}]} {
    %c0 = arith.constant 0 : index
    %c0_0 = arith.constant 0 : index
    %0 = vector.load %arg1[%c0, %c0_0] : memref<16x32xbf16, #tpu.memory_space<vmem>>, vector<16x32xbf16>
    %c0_1 = arith.constant 0 : index
    %c0_2 = arith.constant 0 : index
    %1 = vector.load %arg2[%c0_1, %c0_2] : memref<32x128xbf16, #tpu.memory_space<vmem>>, vector<32x128xbf16>
    %cst = arith.constant dense<0.000000e+00> : vector<16x128xf32>
    %2 = tpu.matmul %0, %1, %cst {dimension_numbers = #tpu.dot_dimension_numbers<[1], [0], [0], [1], [0, 0, 1, 1], [], []>} : vector<16x32xbf16>, vector<32x128xbf16>, vector<16x128xf32> -> vector<16x128xf32>
    %c0_3 = arith.constant 0 : index
    %c0_4 = arith.constant 0 : index
    %3 = vector.load %arg3[%c0_3, %c0_4] : memref<1x128xf32, #tpu.memory_space<vmem>>, vector<1x128xf32>
    %4 = vector.broadcast %3 : vector<1x128xf32> to vector<16x128xf32>
    %5 = arith.addf %2, %4 : vector<16x128xf32>
    %cst_5 = arith.constant 0.000000e+00 : f32
    %6 = vector.broadcast %cst_5 : f32 to vector<16x128xf32>
    %7 = arith.maximumf %5, %6 : vector<16x128xf32>
    %8 = arith.truncf %7 : vector<16x128xf32> to vector<16x128xbf16>
    %c0_6 = arith.constant 0 : index
    %c0_7 = arith.constant 0 : index
    %9 = vector.load %arg4[%c0_6, %c0_7] : memref<128x8xbf16, #tpu.memory_space<vmem>>, vector<128x8xbf16>
    %cst_8 = arith.constant dense<0.000000e+00> : vector<16x8xf32>
    %10 = tpu.matmul %8, %9, %cst_8 {dimension_numbers = #tpu.dot_dimension_numbers<[1], [0], [0], [1], [0, 0, 1, 1], [], []>} : vector<16x128xbf16>, vector<128x8xbf16>, vector<16x8xf32> -> vector<16x8xf32>
    %c0_9 = arith.constant 0 : index
    %c0_10 = arith.constant 0 : index
    %11 = vector.load %arg5[%c0_9, %c0_10] : memref<1x8xf32, #tpu.memory_space<vmem>>, vector<1x8xf32>
    %12 = vector.broadcast %11 : vector<1x8xf32> to vector<16x8xf32>
    %13 = arith.addf %10, %12 : vector<16x8xf32>
    %cst_11 = arith.constant dense<0xFF800000> : vector<16xf32>
    %14 = vector.multi_reduction <maximumf>, %13, %cst_11 [1] : vector<16x8xf32> to vector<16xf32>
    %15 = vector.shape_cast %14 : vector<16xf32> to vector<16x1xf32>
    %16 = vector.broadcast %15 : vector<16x1xf32> to vector<16x8xf32>
    %17 = arith.subf %13, %16 : vector<16x8xf32>
    %18 = math.exp %17 : vector<16x8xf32>
    %cst_12 = arith.constant dense<0.000000e+00> : vector<16xf32>
    %19 = vector.multi_reduction <add>, %18, %cst_12 [1] : vector<16x8xf32> to vector<16xf32>
    %20 = vector.shape_cast %19 : vector<16xf32> to vector<16x1xf32>
    %21 = vector.broadcast %20 : vector<16x1xf32> to vector<16x8xf32>
    %22 = arith.divf %18, %21 : vector<16x8xf32>
    %c0_13 = arith.constant 0 : index
    %c0_14 = arith.constant 0 : index
    %23 = vector.load %arg6[%c0_13, %c0_14] : memref<16x8xf32, #tpu.memory_space<vmem>>, vector<16x8xf32>
    tpu.vector_store %arg6[%c0_13, %c0_14], %22 {strides = array<i32>} : memref<16x8xf32, #tpu.memory_space<vmem>>, vector<16x8xf32>,
    return
  }
  func.func @transform_0(%arg0: i32) -> (i32, i32) {
    %c0_i32 = arith.constant 0 : i32
    %c0_i32_0 = arith.constant 0 : i32
    return %arg0, %c0_i32 : i32, i32
  }
  func.func @transform_1(%arg0: i32) -> (i32, i32) {
    %c0_i32 = arith.constant 0 : i32
    %c0_i32_0 = arith.constant 0 : i32
    %c0_i32_1 = arith.constant 0 : i32
    return %c0_i32, %c0_i32_0 : i32, i32
  }
  func.func @transform_2(%arg0: i32) -> (i32, i32) {
    %c0_i32 = arith.constant 0 : i32
    %c0_i32_0 = arith.constant 0 : i32
    %c0_i32_1 = arith.constant 0 : i32
    return %c0_i32, %c0_i32_0 : i32, i32
  }
  func.func @transform_3(%arg0: i32) -> (i32, i32) {
    %c0_i32 = arith.constant 0 : i32
    %c0_i32_0 = arith.constant 0 : i32
    %c0_i32_1 = arith.constant 0 : i32
    return %c0_i32, %c0_i32_0 : i32, i32
  }
  func.func @transform_4(%arg0: i32) -> (i32, i32) {
    %c0_i32 = arith.constant 0 : i32
    %c0_i32_0 = arith.constant 0 : i32
    %c0_i32_1 = arith.constant 0 : i32
    return %c0_i32, %c0_i32_0 : i32, i32
  }
  func.func @transform_5(%arg0: i32) -> (i32, i32) {
    %c0_i32 = arith.constant 0 : i32
    %c0_i32_0 = arith.constant 0 : i32
    return %arg0, %c0_i32 : i32, i32
  }
}

</mosaic_0001>

<llo_original>
// kernel: actor_forward.1
$region0: #{actor_forward.1}
  #allocation0 [shape = 'u32[]', space=smem, size = 0x4, offset = 0x4, fixed_abs, tag = 'smem constant byte address 0x4 - core index']
  #allocation1 [shape = 'u32[144,128]{1,0:T(1,128)}', space=vmem, size = 0x12000, scoped, tag = 'internal scratch']
  %s0 = inlined_call_operand.vmem [shape: bf16[16,32], index: 0, kind: input, shape index: {}]
  %s1 = inlined_call_operand.vmem [shape: bf16[32,128], index: 1, kind: input, shape index: {}]
  %s2 = inlined_call_operand.vmem [shape: f32[1,128], index: 2, kind: input, shape index: {}]
  %s3 = inlined_call_operand.vmem [shape: bf16[128,8], index: 3, kind: input, shape index: {}]
  %s4 = inlined_call_operand.vmem [shape: f32[1,8], index: 4, kind: input, shape index: {}]
  %s5 = inlined_call_operand.vmem [shape: f32[16,8], index: 5, kind: output, shape index: {}]
  %s6 = sld [smem:[#allocation0]]
  $region30: #{actor_forward.1} parent=0
    _
  %s8 = ssub.s32 1, %s6
  %s9 = scalar_select 0, %s8, %s6
  // Predicated region
  $region2: #{actor_forward.1} parent=0 // pred_check
    _
  $region3: #{actor_forward.1} parent=0 // pred_check_branch
    %11 = sbr.rel (0) target = $region5
  $region4: #{actor_forward.1} parent=0 // pred_region
    _
  $region5: #{actor_forward.1} parent=0 // pred_fallthru
    _
  // Predicated region
  $region6: #{actor_forward.1} parent=0 // pred_check
    _
  $region7: #{actor_forward.1} parent=0 // pred_check_branch
    %13 = sbr.rel (0) target = $region9
  $region8: #{actor_forward.1} parent=0 // pred_region
    _
  $region9: #{actor_forward.1} parent=0 // pred_fallthru
    _
  // Predicated region
  $region10: #{actor_forward.1} parent=0 // pred_check
    _
  $region11: #{actor_forward.1} parent=0 // pred_check_branch
    %15 = sbr.rel (0) target = $region13
  $region12: #{actor_forward.1} parent=0 // pred_region
    _
  $region13: #{actor_forward.1} parent=0 // pred_fallthru
    _
  // Predicated region
  $region14: #{actor_forward.1} parent=0 // pred_check
    _
  $region15: #{actor_forward.1} parent=0 // pred_check_branch
    %17 = sbr.rel (0) target = $region17
  $region16: #{actor_forward.1} parent=0 // pred_region
    _
  $region17: #{actor_forward.1} parent=0 // pred_fallthru
    _
  // Predicated region
  $region18: #{actor_forward.1} parent=0 // pred_check
    _
  $region19: #{actor_forward.1} parent=0 // pred_check_branch
    %19 = sbr.rel (0) target = $region21
  $region20: #{actor_forward.1} parent=0 // pred_region
    _
  $region21: #{actor_forward.1} parent=0 // pred_fallthru
    _
  %v21 = vld [vmem:[%s0] sm:$0xf]
  %v22 = vld [vmem:[%s0 + $0x4] sm:$0xf]
  %v23 = vld [vmem:[%s1] sm:$0xf]
  %v24 = vld [vmem:[%s1 + $0x4] sm:$0xf]
  %v25 = vld [vmem:[%s1 + $0x8] sm:$0xf]
  %v26 = vld [vmem:[%s1 + $0xc] sm:$0xf]
  %v27 = vld [vmem:[%s2] sm:$0x1]
  %v29 = vlaneseq
  %v30 = vshrl.u32 %v29, 7
  %v31 = vsub.s32 0, %v30
  %v32 = vrot.slane %v27, %v31
  %v36 = vunpack.c.l.b16 %v21
  %v37 = vunpack.c.l.b16 %v22
  %v38 = vpack.c.b16 %v37, %v36
  %v43 = vunpack.c.l.b16 %v23
  %v44 = vunpack.c.l.b16 %v24
  %v45 = vunpack.c.l.b16 %v25
  %v46 = vunpack.c.l.b16 %v26
  %v47 = vpack.c.b16 %v44, %v43
  %v48 = vpack.c.b16 %v46, %v45
  %vm51 = vcmask 261120
  %v53 = vsel %vm51, %v38, 0
  %55 = vmatprep.subr.bf16.mxu0 0
  %56 = vmatpush1.bf16.msra.mxu0 %v47
  %57 = vmatprep.subr.bf16.mxu0 0
  %58 = vmatpush1.bf16.msra.mxu0 %v48
  %59 = vmatprep.subr.bf16.mxu0 0
  %60 = vmatpush1.bf16.msra.mxu0 0
  %61 = vmatprep.subr.bf16.mxu0 0
  %62 = vmatpush1.bf16.msra.mxu0 0
  %63 = vmatprep.subr.bf16.mxu0 0
  %64 = vmatpush1.bf16.msra.mxu0 0
  %65 = vmatprep.subr.bf16.mxu0 0
  %66 = vmatpush1.bf16.msra.mxu0 0
  %67 = vmatprep.subr.bf16.mxu0 0
  %68 = vmatpush1.bf16.msra.mxu0 0
  %69 = vmatprep.subr.bf16.mxu0 0
  %70 = vmatpush1.bf16.msra.mxu0 0
  %71 = vmatprep.subr.bf16.mxu0 0
  %72 = vmatpush1.bf16.msra.mxu0 0
  %73 = vmatprep.subr.bf16.mxu0 0
  %74 = vmatpush1.bf16.msra.mxu0 0
  %75 = vmatprep.subr.bf16.mxu0 0
  %76 = vmatpush1.bf16.msra.mxu0 0
  %77 = vmatprep.subr.bf16.mxu0 0
  %78 = vmatpush1.bf16.msra.mxu0 0
  %79 = vmatprep.subr.bf16.mxu0 0
  %80 = vmatpush1.bf16.msra.mxu0 0
  %81 = vmatprep.subr.bf16.mxu0 0
  %82 = vmatpush1.bf16.msra.mxu0 0
  %83 = vmatprep.subr.bf16.mxu0 0
  %84 = vmatpush1.bf16.msra.mxu0 0
  %85 = vmatprep.subr.bf16.mxu0 0
  %86 = vmatpush1.bf16.msra.mxu0 0
  %87 = vmatprep.mubr.bf16.mxu0 0
  %88 = vmatmul.mubr.bf16.gmra.mrb[0].mxu0 %v53
  %v89 = vpop.f32.mrb[0].mxu0
  %v90 = vadd.f32 %v32, %v89
  %v91 = vpop.f32.mrb[0].mxu0
  %v92 = vpop.f32.mrb[0].mxu0
  %v93 = vadd.f32 %v32, %v92
  %v94 = vpop.f32.mrb[0].mxu0
  %95 = vdwg.mxu0
  %v96 = vmax.f32 %v90, 0.0
  %v97 = vmax.f32 %v93, 0.0
  %v98 = vpack.c.bf16 %v97, %v96
  %v99 = vld [vmem:[%s3] sm:$0xf]
  %v100 = vld [vmem:[%s3 + $0x4] sm:$0xf]
  %v101 = vld [vmem:[%s3 + $0x8] sm:$0xf]
  %v102 = vld [vmem:[%s3 + $0xc] sm:$0xf]
  %v103 = vld [vmem:[%s3 + $0x10] sm:$0xf]
  %v104 = vld [vmem:[%s3 + $0x14] sm:$0xf]
  %v105 = vld [vmem:[%s3 + $0x18] sm:$0xf]
  %v106 = vld [vmem:[%s3 + $0x1c] sm:$0xf]
  %v107 = vld [vmem:[%s3 + $0x20] sm:$0xf]
  %v108 = vld [vmem:[%s3 + $0x24] sm:$0xf]
  %v109 = vld [vmem:[%s3 + $0x28] sm:$0xf]
  %v110 = vld [vmem:[%s3 + $0x2c] sm:$0xf]
  %v111 = vld [vmem:[%s3 + $0x30] sm:$0xf]
  %v112 = vld [vmem:[%s3 + $0x34] sm:$0xf]
  %v113 = vld [vmem:[%s3 + $0x38] sm:$0xf]
  %v114 = vld [vmem:[%s3 + $0x3c] sm:$0xf]
  %v115 = vld [vmem:[%s4] sm:$0x1]
  %v117 = vlaneseq
  %v118 = vshrl.u32 %v117, 7
  %v119 = vsub.s32 0, %v118
  %v120 = vrot.slane %v115, %v119
  %v138 = vunpack.c.l.b16 %v99
  %v139 = vunpack.c.l.b16 %v100
  %v140 = vunpack.c.l.b16 %v101
  %v141 = vunpack.c.l.b16 %v102
  %v142 = vunpack.c.l.b16 %v103
  %v143 = vunpack.c.l.b16 %v104
  %v144 = vunpack.c.l.b16 %v105
  %v145 = vunpack.c.l.b16 %v106
  %v146 = vunpack.c.l.b16 %v107
  %v147 = vunpack.c.l.b16 %v108
  %v148 = vunpack.c.l.b16 %v109
  %v149 = vunpack.c.l.b16 %v110
  %v150 = vunpack.c.l.b16 %v111
  %v151 = vunpack.c.l.b16 %v112
  %v152 = vunpack.c.l.b16 %v113
  %v153 = vunpack.c.l.b16 %v114
  %v154 = vpack.c.b16 %v139, %v138
  %v155 = vpack.c.b16 %v141, %v140
  %v156 = vpack.c.b16 %v143, %v142
  %v157 = vpack.c.b16 %v145, %v144
  %v158 = vpack.c.b16 %v147, %v146
  %v159 = vpack.c.b16 %v149, %v148
  %v160 = vpack.c.b16 %v151, %v150
  %v161 = vpack.c.b16 %v153, %v152
  %170 = vmatprep.subr.bf16.mxu0 0
  %171 = vmatpush1.bf16.msra.mxu0 %v154
  %172 = vmatprep.subr.bf16.mxu0 0
  %173 = vmatpush1.bf16.msra.mxu0 %v155
  %174 = vmatprep.subr.bf16.mxu0 0
  %175 = vmatpush1.bf16.msra.mxu0 %v156
  %176 = vmatprep.subr.bf16.mxu0 0
  %177 = vmatpush1.bf16.msra.mxu0 %v157
  %178 = vmatprep.subr.bf16.mxu0 0
  %179 = vmatpush1.bf16.msra.mxu0 %v158
  %180 = vmatprep.subr.bf16.mxu0 0
  %181 = vmatpush1.bf16.msra.mxu0 %v159
  %182 = vmatprep.subr.bf16.mxu0 0
  %183 = vmatpush1.bf16.msra.mxu0 %v160
  %184 = vmatprep.subr.bf16.mxu0 0
  %185 = vmatpush1.bf16.msra.mxu0 %v161
  %186 = vmatprep.subr.bf16.mxu0 0
  %187 = vmatpush1.bf16.msra.mxu0 0
  %188 = vmatprep.subr.bf16.mxu0 0
  %189 = vmatpush1.bf16.msra.mxu0 0
  %190 = vmatprep.subr.bf16.mxu0 0
  %191 = vmatpush1.bf16.msra.mxu0 0
  %192 = vmatprep.subr.bf16.mxu0 0
  %193 = vmatpush1.bf16.msra.mxu0 0
  %194 = vmatprep.subr.bf16.mxu0 0
  %195 = vmatpush1.bf16.msra.mxu0 0
  %196 = vmatprep.subr.bf16.mxu0 0
  %197 = vmatpush1.bf16.msra.mxu0 0
  %198 = vmatprep.subr.bf16.mxu0 0
  %199 = vmatpush1.bf16.msra.mxu0 0
  %200 = vmatprep.subr.bf16.mxu0 0
  %201 = vmatpush1.bf16.msra.mxu0 0
  %202 = vmatprep.mubr.bf16.mxu0 0
  %203 = vmatmul.mubr.bf16.gmra.mrb[0].mxu0 %v98
  %v204 = vpop.f32.mrb[0].mxu0
  %v205 = vadd.f32 %v120, %v204
  %v206 = vpop.f32.mrb[0].mxu0
  %v207 = vpop.f32.mrb[0].mxu0
  %v208 = vadd.f32 %v120, %v207
  %v209 = vpop.f32.mrb[0].mxu0
  %210 = vdwg.mxu0
  %vm211 = vcmask 64512
  %v212 = vsel %vm211, %v205, -inf
  %213 = vmax.xlane.f32.xlu0 %v212
  %v214 = vpop.xlane.xlu0 %213
  %v215 = vsel %vm211, %v208, -inf
  %216 = vmax.xlane.f32.xlu0 %v215
  %v217 = vpop.xlane.xlu0 %216
  %v218 = vsub.f32 %v205, %v214
  %v219 = vsub.f32 %v208, %v217
  %v220 = vmul.f32 %v218, 1.442695
  %v221 = vpow.pop %v220
  %v222 = vmul.f32 %v219, 1.442695
  %v223 = vpow.pop %v222
  %v224 = vsel %vm211, %v221, 0.0
  %225 = vadd.xlane.f32.xlu0 %v224
  %v226 = vpop.xlane.xlu0 %225
  %v227 = vsel %vm211, %v223, 0.0
  %228 = vadd.xlane.f32.xlu0 %v227
  %v229 = vpop.xlane.xlu0 %228
  %v230 = vrcp.pop %v226
  %v231 = vmul.f32 %v221, %v230
  %v232 = vrcp.pop %v229
  %v233 = vmul.f32 %v223, %v232
  %234 = vst.msk [vmem:[%s5] sm:$0xff] %vm211, %v231
  %235 = vst.msk [vmem:[%s5 + $0x8] sm:$0xff] %vm211, %v233
  // Predicated region
  $region22: #{actor_forward.1} parent=0 // pred_check
    _
  $region23: #{actor_forward.1} parent=0 // pred_check_branch
    %237 = sbr.rel (0) target = $region25
  $region24: #{actor_forward.1} parent=0 // pred_region
    _
  $region25: #{actor_forward.1} parent=0 // pred_fallthru
    _
  // Predicated region
  $region26: #{actor_forward.1} parent=0 // pred_check
    _
  $region27: #{actor_forward.1} parent=0 // pred_check_branch
    %239 = sbr.rel (0) target = $region29
  $region28: #{actor_forward.1} parent=0 // pred_region
    _
  $region29: #{actor_forward.1} parent=0 // pred_fallthru
    _

</llo_original>
